<compile_context>
chip_gen: v7x
topology: tpu7x:2x2x1
jax: 0.10.0
libtpu: 0.0.40
codegen_flags: <defaults>
</compile_context>

<pallas_src>
import functools

import jax
import jax.numpy as jnp
from jax.experimental import pallas as pl
from jax.experimental.pallas import tpu as pltpu


def _round_up(v, m):
    return -(-v // m) * m


def _vmem_budget_bytes():
    """Generation-aware VMEM budget: physical capacity minus ~20% headroom."""
    try:
        cap = int(pltpu.get_tpu_info().vmem_capacity_bytes)
    except Exception:
        cap = 64 << 20  # conservative (v7x per-TC size)
    return max(int(cap * 0.8), 16 << 20)


def _legal_tile(t, full):
    """Clamp a tile to the array extent; sub-tiles must be multiples of 8."""
    t = int(max(1, min(int(t), full)))
    if t >= full or full <= 8:
        return full
    return max(8, (t // 8) * 8)


def _choose_tiles(N, C, HW, nc_pad, x_item, w_item, o_item, budget):
    """VMEM-budget-driven (n_tile, c_tile) selection."""

    def need(nt, ct):
        c_tiled = ct < C
        x_blk = nt * ct * HW * x_item            # double-buffered
        o_blk = nt * nc_pad * o_item             # double-buffered
        w_blk = ct * nc_pad * w_item             # 1 buffer when constant, else 2
        b_blk = nc_pad * 4                       # single buffer
        acc = nt * nc_pad * 4 if c_tiled else 0  # f32 logits accumulator
        w_bufs = 2 if c_tiled else 1
        return 2 * x_blk + 2 * o_blk + w_bufs * w_blk + b_blk + acc + (1 << 20)

    def floor8(v):
        return max(8, (v // 8) * 8)

    # Batch tile: >= 2 grid steps when N >= 16 so the "parallel" axis shards
    # across both v7x TensorCores (and the pipeline always has >= 2 steps).
    nt = N if N < 16 else floor8((N + 1) // 2)
    nt = min(nt, N)

    # Prefer the fused full-C path; shrink the batch tile (not below 64) first.
    n_floor = min(nt, 64)
    while need(nt, C) > budget and nt > n_floor:
        nt = max(n_floor, floor8(nt // 2))
    if need(nt, C) <= budget:
        return nt, C

    # Still too big: tile the channel (reduction) axis instead of shrinking
    # n_tile below pipeline-efficient sizes.
    ct = floor8(C)
    while need(nt, ct) > budget and ct > 8:
        ct = floor8(ct // 2)
    while need(nt, ct) > budget and nt > 8:
        nt = floor8(nt // 2)
    return nt, ct


def _anyhead_fused_kernel(x_ref, w_ref, b_ref, o_ref, *, inv_hw):
    # x_ref: (n_tile, C, HW)  NCHW consumed directly, HW lane-resident
    # w_ref: (C, nc_pad)      transposed fc weight (original dtype)
    # b_ref: (1, nc_pad) f32  zero-padded bias
    # o_ref: (n_tile, nc_pad) logits
    pooled = jnp.sum(x_ref[...], axis=-1, dtype=jnp.float32) * inv_hw  # (n, C)
    logits = jnp.dot(pooled.astype(w_ref.dtype), w_ref[...],
                     preferred_element_type=jnp.float32) + b_ref[...]
    o_ref[...] = logits.astype(o_ref.dtype)


def _anyhead_ctiled_kernel(x_ref, w_ref, b_ref, o_ref, acc_ref, *,
                           inv_hw, c_total, c_tile):
    # Channel-tiled variant: grid = (n_tiles, c_tiles), c is the reduction axis.
    # acc_ref: (n_tile, nc_pad) f32 logits accumulator, resident across c.
    c_step = pl.program_id(1)

    pooled = jnp.sum(x_ref[...], axis=-1, dtype=jnp.float32) * inv_hw  # (n, ct)
    if c_total % c_tile != 0:
        # Ragged last channel block: zero the out-of-range lanes so stale VMEM
        # contents (possibly NaN) never reach the MXU accumulation.
        valid = c_total - c_step * c_tile
        lane = jax.lax.broadcasted_iota(jnp.int32, pooled.shape, 1)
        pooled = jnp.where(lane < valid, pooled, 0.0)

    partial = jnp.dot(pooled.astype(w_ref.dtype), w_ref[...],
                      preferred_element_type=jnp.float32)

    @pl.when(c_step == 0)
    def _():
        acc_ref[...] = jnp.broadcast_to(b_ref[...], acc_ref.shape)

    acc_ref[...] += partial

    @pl.when(c_step == pl.num_programs(1) - 1)
    def _():
        o_ref[...] = acc_ref[...].astype(o_ref.dtype)


def anyhead_forward(x_nchw, weight, bias, *, n_tile=None, c_tile=None,
                    out_dtype=None):
    """AdaptiveAvgPool2d((1,1)) + Linear(w_in, num_classes), one Pallas call.

    x_nchw: (N, C, H, W); weight: (num_classes, C); bias: (num_classes,).
    Returns (N, num_classes) logits in `out_dtype` (default: promote(x, w)).
    """
    N, C, H, W = x_nchw.shape
    num_classes = weight.shape[0]
    assert weight.shape[1] == C and bias.shape == (num_classes,)
    HW = H * W
    if out_dtype is None:
        out_dtype = jnp.result_type(x_nchw.dtype, weight.dtype)

    # Free contiguous reshape — no HBM transpose / activation padding.
    # TODO(synk): in a full network the producing conv could emit (N, HW, C)
    # directly, which would let the spatial reduce run on sublanes instead.
    x = x_nchw.reshape(N, C, HW)

    # Lane-dense class dim (unmasked stores). Weight kept in its own dtype
    # (pass bf16 weights to halve weight traffic/VMEM); mean scale applied to
    # the f32 pooled sums in-kernel.
    nc_pad = _round_up(max(num_classes, 1), 128)
    w_t = weight.T  # (C, num_classes)
    if nc_pad != num_classes:
        w_t = jnp.pad(w_t, ((0, 0), (0, nc_pad - num_classes)))
    b_f = bias.astype(jnp.float32)
    if nc_pad != num_classes:
        b_f = jnp.pad(b_f, (0, nc_pad - num_classes))
    b_2d = b_f.reshape(1, nc_pad)

    budget = _vmem_budget_bytes()
    x_item = jnp.dtype(x.dtype).itemsize
    w_item = jnp.dtype(w_t.dtype).itemsize
    o_item = jnp.dtype(out_dtype).itemsize

    auto_nt, auto_ct = _choose_tiles(N, C, HW, nc_pad, x_item, w_item, o_item,
                                     budget)
    nt = _legal_tile(n_tile if n_tile is not None else auto_nt, N)
    ct = _legal_tile(c_tile if c_tile is not None else auto_ct, C)

    c_tiled = ct < C
    n_iters = pl.cdiv(N, nt)
    inv_hw = 1.0 / float(HW)

    if not c_tiled:
        # Common case: full C (and full HW) in one block — no reduction axis,
        # no scratch accumulator, no per-step @pl.when overhead.
        grid = (n_iters,)
        kernel = functools.partial(_anyhead_fused_kernel, inv_hw=inv_hw)
        in_specs = [
            pl.BlockSpec((nt, C, HW), lambda n: (n, 0, 0)),
            # Constant blocks: single resident buffer (no double-buffering).
            pl.BlockSpec((C, nc_pad), lambda n: (0, 0),
                         pipeline_mode=pl.Buffered(1)),
            pl.BlockSpec((1, nc_pad), lambda n: (0, 0),
                         pipeline_mode=pl.Buffered(1)),
        ]
        out_specs = pl.BlockSpec((nt, nc_pad), lambda n: (n, 0))
        scratch_shapes = []
        semantics = ("parallel",)
    else:
        c_iters = pl.cdiv(C, ct)
        # Keep the weight's reduction dim a whole number of c tiles so the last
        # weight block is never a ragged (stale-VMEM) read; pad rows are zero.
        k_rows = c_iters * ct
        if k_rows != C:
            w_t = jnp.pad(w_t, ((0, k_rows - C), (0, 0)))
        grid = (n_iters, c_iters)
        kernel = functools.partial(_anyhead_ctiled_kernel, inv_hw=inv_hw,
                                   c_total=C, c_tile=ct)
        in_specs = [
            pl.BlockSpec((nt, ct, HW), lambda n, c: (n, c, 0)),
            pl.BlockSpec((ct, nc_pad), lambda n, c: (c, 0)),
            pl.BlockSpec((1, nc_pad), lambda n, c: (0, 0),
                         pipeline_mode=pl.Buffered(1)),
        ]
        out_specs = pl.BlockSpec((nt, nc_pad), lambda n, c: (n, 0))
        scratch_shapes = [pltpu.VMEM((nt, nc_pad), jnp.float32)]
        semantics = ("parallel", "arbitrary")

    out = pl.pallas_call(
        kernel,
        out_shape=jax.ShapeDtypeStruct((N, nc_pad), out_dtype),
        grid=grid,
        in_specs=in_specs,
        out_specs=out_specs,
        scratch_shapes=scratch_shapes,
        compiler_params=pltpu.CompilerParams(
            dimension_semantics=semantics,
            vmem_limit_bytes=int(budget),
        ),
    )(x, w_t, b_2d)

    return out[:, :num_classes]


def init_anyhead_params(key, w_in, num_classes, dtype=jnp.float32):
    # Deterministic init mimicking nn.Linear defaults (uniform +-1/sqrt(w_in)).
    kw, kb = jax.random.split(key)
    bound = 1.0 / (w_in ** 0.5)
    weight = jax.random.uniform(kw, (num_classes, w_in), dtype, -bound, bound)
    bias = jax.random.uniform(kb, (num_classes,), dtype, -bound, bound)
    return weight, bias


if __name__ == "__main__":
    key = jax.random.PRNGKey(0)
    kx, kp, kx2, kp2, kx3, kp3 = jax.random.split(key, 6)

    # --- main check: batch=2, w_in=4, spatial=16x16, 8 classes (fused path) --
    N, C, H, W = 2, 4, 16, 16
    num_classes = 8
    x = jax.random.normal(kx, (N, C, H, W), dtype=jnp.float32)
    weight, bias = init_anyhead_params(kp, C, num_classes)

    out = jax.block_until_ready(anyhead_forward(x, weight, bias))
    ref = jnp.mean(x, axis=(2, 3)) @ weight.T + bias
    assert out.shape == (N, num_classes)
    assert jnp.allclose(out, ref, atol=1e-4, rtol=1e-4)

    # --- second check: batch tiling with a ragged last batch block -----------
    N2, C2, H2, W2, nc2 = 10, 8, 7, 7, 10
    x2 = jax.random.normal(kx2, (N2, C2, H2, W2), dtype=jnp.float32)
    w2, b2 = init_anyhead_params(kp2, C2, nc2)
    out2 = jax.block_until_ready(anyhead_forward(x2, w2, b2, n_tile=8))
    ref2 = jnp.mean(x2, axis=(2, 3)) @ w2.T + b2
    assert out2.shape == (N2, nc2)
    assert jnp.allclose(out2, ref2, atol=1e-4, rtol=1e-4)

    # --- third check: channel-tiled reduction path with a ragged last C block
    N3, C3, H3, W3, nc3 = 4, 20, 4, 4, 6
    x3 = jax.random.normal(kx3, (N3, C3, H3, W3), dtype=jnp.float32)
    w3, b3 = init_anyhead_params(kp3, C3, nc3)
    out3 = jax.block_until_ready(anyhead_forward(x3, w3, b3, c_tile=8))
    ref3 = jnp.mean(x3, axis=(2, 3)) @ w3.T + b3
    assert out3.shape == (N3, nc3)
    assert jnp.allclose(out3, ref3, atol=1e-4, rtol=1e-4)

    print("KERNEL_OK")
</pallas_src>

<mosaic_0001>
module attributes {stable_mosaic.version = 11 : i64} {
  func.func @_anyhead_fused_kernel(%arg0: i32, %arg1: memref<2x4x256xf32, #tpu.memory_space<vmem>>, %arg2: memref<4x128xf32, #tpu.memory_space<vmem>>, %arg3: memref<1x128xf32, #tpu.memory_space<vmem>>, %arg4: memref<2x128xf32, #tpu.memory_space<vmem>>) attributes {dimension_semantics = [#tpu.dimension_semantics<parallel>], iteration_bounds = array<i64: 1>, scalar_prefetch = 0 : i64, scratch_operands = 0 : i64, tpu.core_type = #tpu.core_type<tc>, window_params = [{transform_indices = @transform_0, window_bounds = array<i64: 2, 4, 256>}, {pipeline_mode = #tpu.pipeline_mode<synchronous>, transform_indices = @transform_1, window_bounds = array<i64: 4, 128>}, {pipeline_mode = #tpu.pipeline_mode<synchronous>, transform_indices = @transform_2, window_bounds = array<i64: 1, 128>}, {transform_indices = @transform_3, window_bounds = array<i64: 2, 128>}]} {
    %c0 = arith.constant 0 : index
    %c0_0 = arith.constant 0 : index
    %c0_1 = arith.constant 0 : index
    %0 = vector.load %arg1[%c0, %c0_0, %c0_1] : memref<2x4x256xf32, #tpu.memory_space<vmem>>, vector<2x4x256xf32>
    %cst = arith.constant dense<0.000000e+00> : vector<2x4xf32>
    %1 = vector.multi_reduction <add>, %0, %cst [2] : vector<2x4x256xf32> to vector<2x4xf32>
    %cst_2 = arith.constant 3.906250e-03 : f32
    %2 = vector.broadcast %cst_2 : f32 to vector<2x4xf32>
    %3 = arith.mulf %1, %2 : vector<2x4xf32>
    %c0_3 = arith.constant 0 : index
    %c0_4 = arith.constant 0 : index
    %4 = vector.load %arg2[%c0_3, %c0_4] : memref<4x128xf32, #tpu.memory_space<vmem>>, vector<4x128xf32>
    %cst_5 = arith.constant dense<0.000000e+00> : vector<2x128xf32>
    %5 = tpu.matmul %3, %4, %cst_5 {dimension_numbers = #tpu.dot_dimension_numbers<[1], [0], [0], [1], [0, 0, 1, 1], [], []>} : vector<2x4xf32>, vector<4x128xf32>, vector<2x128xf32> -> vector<2x128xf32>
    %c0_6 = arith.constant 0 : index
    %c0_7 = arith.constant 0 : index
    %6 = vector.load %arg3[%c0_6, %c0_7] : memref<1x128xf32, #tpu.memory_space<vmem>>, vector<1x128xf32>
    %7 = vector.broadcast %6 : vector<1x128xf32> to vector<2x128xf32>
    %8 = arith.addf %5, %7 : vector<2x128xf32>
    %c0_8 = arith.constant 0 : index
    %c0_9 = arith.constant 0 : index
    %9 = vector.load %arg4[%c0_8, %c0_9] : memref<2x128xf32, #tpu.memory_space<vmem>>, vector<2x128xf32>
    tpu.vector_store %arg4[%c0_8, %c0_9], %8 {strides = array<i32>} : memref<2x128xf32, #tpu.memory_space<vmem>>, vector<2x128xf32>,
    return
  }
  func.func @transform_0(%arg0: i32) -> (i32, i32, i32) {
    %c0_i32 = arith.constant 0 : i32
    %c0_i32_0 = arith.constant 0 : i32
    %c0_i32_1 = arith.constant 0 : i32
    return %arg0, %c0_i32, %c0_i32_0 : i32, i32, i32
  }
  func.func @transform_1(%arg0: i32) -> (i32, i32) {
    %c0_i32 = arith.constant 0 : i32
    %c0_i32_0 = arith.constant 0 : i32
    %c0_i32_1 = arith.constant 0 : i32
    return %c0_i32, %c0_i32_0 : i32, i32
  }
  func.func @transform_2(%arg0: i32) -> (i32, i32) {
    %c0_i32 = arith.constant 0 : i32
    %c0_i32_0 = arith.constant 0 : i32
    %c0_i32_1 = arith.constant 0 : i32
    return %c0_i32, %c0_i32_0 : i32, i32
  }
  func.func @transform_3(%arg0: i32) -> (i32, i32) {
    %c0_i32 = arith.constant 0 : i32
    %c0_i32_0 = arith.constant 0 : i32
    return %arg0, %c0_i32 : i32, i32
  }
}

</mosaic_0001>

<llo_original>
// kernel: tpu_custom_call.1
$region0: #{tpu_custom_call.1}
  #allocation0 [shape = 'u32[]', space=smem, size = 0x4, offset = 0x4, fixed_abs, tag = 'smem constant byte address 0x4 - core index']
  #allocation1 [shape = 'u32[144,128]{1,0:T(1,128)}', space=vmem, size = 0x12000, scoped, tag = 'internal scratch']
  %s0 = inlined_call_operand.hbm [shape: f32[2,4,256], index: 0, kind: input, shape index: {}]
  %s1 = inlined_call_operand.hbm [shape: f32[4,128], index: 1, kind: input, shape index: {}]
  %s2 = inlined_call_operand.vmem [shape: f32[1,128], index: 2, kind: input, shape index: {}]
  %s3 = inlined_call_operand.hbm [shape: f32[2,128], index: 3, kind: output, shape index: {}]
  %s4 = sld [smem:[#allocation0]]
  $region30: #{tpu_custom_call.1} parent=0
    _
  %s6 = ssub.s32 1, %s4
  %s7 = scalar_select 0, %s6, %s4
  $region1: #{tpu_custom_call.1} parent=0
    #allocation2 [shape = 'u8[8192]{0}', space=vmem, size = 0x2000, scoped, tag = 'input window, operand 0, single buffered']
    #allocation3 [shape = 's32[1]{0}', space=sflag, size = 0x4, scoped, tag = 'scoped memory for tpu_custom_call.1']
    #allocation4 [shape = 's32[1]{0}', space=sflag, size = 0x4, scoped, tag = 'scoped memory for tpu_custom_call.1']
    #allocation5 [shape = 'u8[2048]{0}', space=vmem, size = 0x800, scoped, tag = 'input window, operand 1, single buffered']
    #allocation6 [shape = 's32[1]{0}', space=sflag, size = 0x4, scoped, tag = 'scoped memory for tpu_custom_call.1']
    #allocation7 [shape = 'u8[1024]{0}', space=vmem, size = 0x400, scoped, tag = 'output window, operand 0, single buffered']
    %8 = vsyncpa [#allocation3], 0
    %9 = vsyncpa [#allocation6], 0
    %10 = vsyncpa [#allocation4], 0
    // Predicated region
    $region2: #{tpu_custom_call.1} parent=1 // pred_check
      _
    $region3: #{tpu_custom_call.1} parent=1 // pred_check_branch
      %12 = sbr.rel (0) target = $region5
    $region4: #{tpu_custom_call.1} parent=1 // pred_region
      %s14 = ssub.s32 256, 256
      %15 = vsyncadd [#allocation3], %s14
      %s16 = sshll.u32 [#allocation2], 4
      %s17 = int_to_ptr.vmem [resolvable:$true] %s16
      %22 = dma.hbm_to_vmem [thread:$0]  %s0, 256, %s17, [#allocation3], 128, 128, 8
    $region5: #{tpu_custom_call.1} parent=1 // pred_fallthru
      _
    // Predicated region
    $region6: #{tpu_custom_call.1} parent=1 // pred_check
      _
    $region7: #{tpu_custom_call.1} parent=1 // pred_check_branch
      %24 = sbr.rel (0) target = $region9
    $region8: #{tpu_custom_call.1} parent=1 // pred_region
      %s26 = ssub.s32 64, 64
      %27 = vsyncadd [#allocation6], %s26
      %s29 = sshll.u32 [#allocation5], 4
      %s30 = int_to_ptr.vmem [resolvable:$true] %s29
      %32 = dma.hbm_to_vmem [thread:$0]  %s1, 64, %s30, [#allocation6]
    $region9: #{tpu_custom_call.1} parent=1 // pred_fallthru
      _
    // Predicated region
    $region10: #{tpu_custom_call.1} parent=1 // pred_check
      _
    $region11: #{tpu_custom_call.1} parent=1 // pred_check_branch
      %34 = sbr.rel (0) target = $region13
    $region12: #{tpu_custom_call.1} parent=1 // pred_region
      _
    $region13: #{tpu_custom_call.1} parent=1 // pred_fallthru
      _
    // Predicated region
    $region14: #{tpu_custom_call.1} parent=1 // pred_check
      _
    $region15: #{tpu_custom_call.1} parent=1 // pred_check_branch
      %36 = sbr.rel (0) target = $region17
    $region16: #{tpu_custom_call.1} parent=1 // pred_region
      %37 = dma.done [#allocation3], 256
    $region17: #{tpu_custom_call.1} parent=1 // pred_fallthru
      _
    // Predicated region
    $region18: #{tpu_custom_call.1} parent=1 // pred_check
      _
    $region19: #{tpu_custom_call.1} parent=1 // pred_check_branch
      %39 = sbr.rel (0) target = $region21
    $region20: #{tpu_custom_call.1} parent=1 // pred_region
      %40 = dma.done [#allocation6], 64
    $region21: #{tpu_custom_call.1} parent=1 // pred_fallthru
      _
    %v41 = vld [vmem:[#allocation2] sm:$0xff]
    %v42 = vld [vmem:[#allocation2 + $0x8] sm:$0xff]
    %v45 = vcombine.high %v41, %v41
    %v46 = vcombine.high %v42, %v42
    %vm49 = vcmask 1043456
    %v50 = vsel %vm49, %v41, 0.0
    %v51 = vsel %vm49, %v45, 0.0
    %v52 = vadd.f32 %v50, %v51
    %53 = vadd.xlane.f32.xlu0 %v52
    %v54 = vpop.xlane.xlu0 %53
    %v55 = vsel %vm49, %v42, 0.0
    %v56 = vsel %vm49, %v46, 0.0
    %v57 = vadd.f32 %v55, %v56
    %58 = vadd.xlane.f32.xlu0 %v57
    %v59 = vpop.xlane.xlu0 %58
    %v60 = vmul.f32 %v54, 0.00390625
    %v61 = vmul.f32 %v59, 0.00390625
    %v62 = vld [vmem:[#allocation5] sm:$0xf]
    %v63 = vld [vmem:[%s2] sm:$0x1]
    %v65 = vlaneseq
    %v66 = vshrl.u32 %v65, 7
    %v67 = vsub.s32 0, %v66
    %v68 = vrot.slane %v63, %v67
    %v72 = vlaneseq
    %v73 = vand.u32 %v72, 127
    %v74 = vlaneseq
    %v75 = vshrl.u32 %v74, 7
    %v76 = vsub.s32 %v73, %v75
    %v77 = vrot.slane %v60, %v76
    %v78 = vlaneseq
    %v79 = vshrl.u32 %v78, 7
    %v80 = vsub.s32 %v73, %v79
    %v81 = vrot.slane %v61, %v80
    %vm82 = vcmask 1041409
    %v83 = vsel %vm82, %v81, %v77
    %vm84 = vcmask 31744
    %v85 = vsel %vm84, %v83, 0
    %v88 = vsel %vm49, %v62, 0
    %90 = vmatprep.subr.mxu0 0.0
    %91 = vmatpush1.msra.mxu0 %v88
    %92 = vmatprep.subr.mxu0 0.0
    %93 = vmatpush1.msra.mxu0 0.0
    %94 = vmatprep.subr.mxu0 0.0
    %95 = vmatpush1.msra.mxu0 0.0
    %96 = vmatprep.subr.mxu0 0.0
    %97 = vmatpush1.msra.mxu0 0.0
    %98 = vmatprep.subr.mxu0 0.0
    %99 = vmatpush1.msra.mxu0 0.0
    %100 = vmatprep.subr.mxu0 0.0
    %101 = vmatpush1.msra.mxu0 0.0
    %102 = vmatprep.subr.mxu0 0.0
    %103 = vmatpush1.msra.mxu0 0.0
    %104 = vmatprep.subr.mxu0 0.0
    %105 = vmatpush1.msra.mxu0 0.0
    %106 = vmatprep.subr.mxu0 0.0
    %107 = vmatpush1.msra.mxu0 0.0
    %108 = vmatprep.subr.mxu0 0.0
    %109 = vmatpush1.msra.mxu0 0.0
    %110 = vmatprep.subr.mxu0 0.0
    %111 = vmatpush1.msra.mxu0 0.0
    %112 = vmatprep.subr.mxu0 0.0
    %113 = vmatpush1.msra.mxu0 0.0
    %114 = vmatprep.subr.mxu0 0.0
    %115 = vmatpush1.msra.mxu0 0.0
    %116 = vmatprep.subr.mxu0 0.0
    %117 = vmatpush1.msra.mxu0 0.0
    %118 = vmatprep.subr.mxu0 0.0
    %119 = vmatpush1.msra.mxu0 0.0
    %120 = vmatprep.subr.mxu0 0.0
    %121 = vmatpush1.msra.mxu0 0.0
    %122 = vmatprep.subr.mxu0 0.0
    %123 = vmatpush1.msra.mxu0 0.0
    %124 = vmatprep.subr.mxu0 0.0
    %125 = vmatpush1.msra.mxu0 0.0
    %126 = vmatprep.subr.mxu0 0.0
    %127 = vmatpush1.msra.mxu0 0.0
    %128 = vmatprep.subr.mxu0 0.0
    %129 = vmatpush1.msra.mxu0 0.0
    %130 = vmatprep.subr.mxu0 0.0
    %131 = vmatpush1.msra.mxu0 0.0
    %132 = vmatprep.subr.mxu0 0.0
    %133 = vmatpush1.msra.mxu0 0.0
    %134 = vmatprep.subr.mxu0 0.0
    %135 = vmatpush1.msra.mxu0 0.0
    %136 = vmatprep.subr.mxu0 0.0
    %137 = vmatpush1.msra.mxu0 0.0
    %138 = vmatprep.subr.mxu0 0.0
    %139 = vmatpush1.msra.mxu0 0.0
    %140 = vmatprep.subr.mxu0 0.0
    %141 = vmatpush1.msra.mxu0 0.0
    %142 = vmatprep.subr.mxu0 0.0
    %143 = vmatpush1.msra.mxu0 0.0
    %144 = vmatprep.subr.mxu0 0.0
    %145 = vmatpush1.msra.mxu0 0.0
    %146 = vmatprep.subr.mxu0 0.0
    %147 = vmatpush1.msra.mxu0 0.0
    %148 = vmatprep.subr.mxu0 0.0
    %149 = vmatpush1.msra.mxu0 0.0
    %150 = vmatprep.subr.mxu0 0.0
    %151 = vmatpush1.msra.mxu0 0.0
    %152 = vmatprep.subr.mxu0 0.0
    %153 = vmatpush1.msra.mxu0 0.0
    %154 = vmatprep.mubr.f32.mxu0 0.0
    %155 = vmatmul.mubr.f32.gmra.mrb[0].mxu0 %v85
    %v156 = vpop.f32.mrb[0].mxu0
    %v157 = vadd.f32 %v68, %v156
    %v158 = vpop.f32.mrb[0].mxu0
    %159 = vdwg.mxu0
    %160 = vst [vmem:[#allocation7] sm:$0x3] %v157
    // Predicated region
    $region22: #{tpu_custom_call.1} parent=1 // pred_check
      _
    $region23: #{tpu_custom_call.1} parent=1 // pred_check_branch
      %162 = sbr.rel (0) target = $region25
    $region24: #{tpu_custom_call.1} parent=1 // pred_region
      %s164 = ssub.s32 32, 32
      %165 = vsyncadd [#allocation4], %s164
      %s167 = sshll.u32 [#allocation7], 4
      %s168 = int_to_ptr.vmem [resolvable:$true] %s167
      %170 = dma.vmem_to_hbm [thread:$0]  %s168, 32, %s3, [#allocation4]
    $region25: #{tpu_custom_call.1} parent=1 // pred_fallthru
      _
    // Predicated region
    $region26: #{tpu_custom_call.1} parent=1 // pred_check
      _
    $region27: #{tpu_custom_call.1} parent=1 // pred_check_branch
      %172 = sbr.rel (0) target = $region29
    $region28: #{tpu_custom_call.1} parent=1 // pred_region
      %173 = dma.done [#allocation4], 32
    $region29: #{tpu_custom_call.1} parent=1 // pred_fallthru
      _
    %174 = vsyncpa [#allocation3], 1
    %175 = vsyncpa [#allocation6], 1
    %176 = vsyncpa [#allocation4], 1

</llo_original>
